<compile_context>
chip_gen: v7x
topology: tpu7x:2x2x1
jax: 0.10.0
libtpu: 0.0.40
codegen_flags: <defaults>
</compile_context>

<pallas_src>
import functools

import numpy as np
import jax
import jax.numpy as jnp
from jax import lax
from jax.experimental import pallas as pl
from jax.experimental.pallas import tpu as pltpu


# ---------------------------------------------------------------------------
# Generation-aware VMEM limits
# ---------------------------------------------------------------------------
def _tpu_vmem_capacity_bytes():
    try:
        info = pltpu.get_tpu_info()
        cap = getattr(info, "vmem_capacity_bytes", None)
        if cap:
            return int(cap)
    except Exception:
        pass
    return 64 << 20          # conservative default (v7x per-TensorCore VMEM)


_VMEM_CAP = _tpu_vmem_capacity_bytes()
# ~51 MiB on v7x (64 MiB physical), ~102 MiB on v5e/v6e (128 MiB physical)
_VMEM_LIMIT = max(min(int(_VMEM_CAP * 0.8), 110 << 20), 32 << 20)


# ---------------------------------------------------------------------------
# Linear projection kernel ((M, N)-tiled, weight tile resident across the M sweep)
# ---------------------------------------------------------------------------
def _linear_kernel(x_ref, w_ref, b_ref, o_ref):
    x = x_ref[...].astype(w_ref.dtype)                     # bf16 MXU operands
    acc = jnp.dot(x, w_ref[...], preferred_element_type=jnp.float32)
    o_ref[...] = (acc + b_ref[...].astype(jnp.float32)).astype(o_ref.dtype)


def _pick_block(n, candidates=(512, 256, 128, 64, 32, 16, 8)):
    for c in candidates:
        if n % c == 0:
            return c
    return n


def pallas_linear(x, w, b):
    """x: [M, Din] (f32/bf16), w: [Din, Dout] (bf16 preferred), b: [Dout] f32 -> [M, Dout] x.dtype"""
    M, Din = x.shape
    Dout = w.shape[1]
    bm = _pick_block(M)
    bn = _pick_block(Dout)
    # TODO(synk): add K tiling with a VMEM f32 accumulator for very large d_model (Din stays
    #             resident here, fine up to a few thousand features).
    # TODO(synk): pipeline_mode=pl.Buffered(1) on the weight/bias specs would also drop the
    #             resident-weight double buffer.
    return pl.pallas_call(
        _linear_kernel,
        out_shape=jax.ShapeDtypeStruct((M, Dout), x.dtype),
        grid=(Dout // bn, M // bm),        # N tile outer -> weight tile resident across M sweep
        in_specs=[
            pl.BlockSpec((bm, Din), lambda j, i: (i, 0)),
            pl.BlockSpec((Din, bn), lambda j, i: (0, j)),
            pl.BlockSpec((1, bn), lambda j, i: (0, j)),
        ],
        out_specs=pl.BlockSpec((bm, bn), lambda j, i: (i, j)),
        compiler_params=pltpu.CompilerParams(
            dimension_semantics=("parallel", "parallel"),
            vmem_limit_bytes=_VMEM_LIMIT),
    )(x, w, b.reshape(1, Dout))


# ---------------------------------------------------------------------------
# Attention kernel (rotary fused, grouped heads, query-tiled, lane-dense output)
# ---------------------------------------------------------------------------
def _attn_kernel(cos_q_ref, sin_q_ref, cos_k_ref, sin_k_ref,
                 q_ref, k_ref, v_ref, o_ref, w_ref, *, n_group, d_k, d_v):
    dh = d_k // 2
    gdh = n_group * dh

    cos_q = cos_q_ref[...]                                  # [tq, G*dh] f32
    sin_q = sin_q_ref[...]
    cos_k = cos_k_ref[...]                                  # [L,  G*dh] f32
    sin_k = sin_k_ref[...]

    q = q_ref[0].astype(jnp.float32)                        # [tq, G*d_k] (scale folded into W_Q)
    k = k_ref[0].astype(jnp.float32)                        # [L,  G*d_k]

    # Group-vectorized rotary: W_Q/W_K columns are in group-level half-split layout
    # (all heads' even columns, then all heads' odd columns), so the interleaved rotation
    # becomes 8 dense VPU ops on full [*, G*d_k/2] blocks -- no cross-lane rolls.
    q1, q2 = q[:, :gdh], q[:, gdh:]
    k1, k2 = k[:, :gdh], k[:, gdh:]
    qr1 = q1 * cos_q - q2 * sin_q
    qr2 = q2 * cos_q + q1 * sin_q
    kr1 = k1 * cos_k - k2 * sin_k
    kr2 = k2 * cos_k + k1 * sin_k

    dn_qk = (((1,), (1,)), ((), ()))                        # q @ k^T without transposing k
    dn_pv = (((1,), (0,)), ((), ()))

    # Heads of this group, unrolled.  Per-head temporaries are only [tq, L] thanks to the
    # query-tile grid axis, so live ranges stay small even with the loop unrolled; G is kept
    # small (G*d_k <= 512 lanes) by _pick_head_group.
    for g in range(n_group):
        lo, hi = g * dh, (g + 1) * dh
        # head-contiguous rotated operands -> single full-depth (d_k) MXU contraction per head
        qh = jnp.concatenate([qr1[:, lo:hi], qr2[:, lo:hi]], axis=1).astype(jnp.bfloat16)
        kh = jnp.concatenate([kr1[:, lo:hi], kr2[:, lo:hi]], axis=1).astype(jnp.bfloat16)
        scores = lax.dot_general(qh, kh, dn_qk, preferred_element_type=jnp.float32)

        # numerically stable softmax along keys (full key axis resident -> exact)
        m = jnp.max(scores, axis=-1, keepdims=True)
        p = jnp.exp(scores - m)                             # exp kept in f32 (v5e-safe)
        denom = jnp.sum(p, axis=-1, keepdims=True)
        attn = p * pl.reciprocal(denom, approx=True)        # EUP reciprocal, VPU stays free

        v = v_ref[0, :, g * d_v:(g + 1) * d_v].astype(jnp.bfloat16)
        out = lax.dot_general(attn.astype(jnp.bfloat16), v, dn_pv,
                              preferred_element_type=jnp.float32)

        o_ref[0, :, g * d_v:(g + 1) * d_v] = out.astype(o_ref.dtype)
        w_ref[0, g] = attn.astype(w_ref.dtype)


def _pick_head_group(n_heads, d_k, d_v):
    """Smallest divisor G of n_heads whose lane width G*d_k is MXU-friendly (256 for the
    2x256 MXUs of v6e/v7x, falling back to 128 for v5e / small models); keeps per-step blocks
    narrow.  Falls back to all heads (full-width blocks)."""
    divisors = [g for g in range(1, n_heads + 1) if n_heads % g == 0]
    for align in (256, 128):
        ok = [g for g in divisors
              if (g * d_k) % align == 0 and (g * d_v) % 128 == 0 and g * d_k <= 512]
        if ok:
            return min(ok)
    return n_heads


def _pick_query_tile(L, G, d_k, d_v, w_itemsize, budget_bytes):
    """Largest query tile (multiple of 8 dividing L) whose per-grid-step VMEM footprint
    (double-buffered q/k/v/o/attn-weights blocks + rotary and softmax temporaries) fits."""
    cands = sorted((t for t in range(8, L + 1, 8) if L % t == 0), reverse=True)
    if not cands:
        return L
    dh = d_k // 2
    for tq in cands:
        blocks = 2 * 4 * (tq * G * d_k + L * G * d_k + L * G * d_v + tq * G * d_v)  # q,k,v,o
        blocks += 2 * w_itemsize * G * tq * L                                       # weights out
        temps = 8 * (tq + L) * G * dh                                               # qr*/kr* f32
        temps += 2 * 4 * G * tq * L                                                 # scores+attn
        tables = 8 * (tq + L) * G * dh                                              # cos/sin views
        if blocks + temps + tables <= budget_bytes:
            return tq
    return cands[-1]


def _qmap(off):
    return lambda b, g, t: (b, t, off + g)


def _kvmap(off):
    return lambda b, g, t: (b, 0, off + g)


def pallas_mha_attention(q_src, k_src, v_src, cos_g, sin_g, *, n_heads, d_k, d_v,
                         group, q_off=0, k_off=0, v_off=0,
                         out_dtype=None, weights_dtype=jnp.float32):
    """q/k/v sources in [B, L, *] layout (possibly the same fused activation with block-column
    offsets).  Returns (out [B, L, n_heads*d_v], attn [B, n_heads, L, L])."""
    B, L, _ = q_src.shape
    G = group
    assert n_heads % G == 0
    n_grp = n_heads // G
    dh = d_k // 2
    out_dtype = q_src.dtype if out_dtype is None else out_dtype

    w_isz = np.dtype(weights_dtype).itemsize
    tq = _pick_query_tile(L, G, d_k, d_v, w_isz, budget_bytes=int(_VMEM_LIMIT * 0.4))
    n_qt = L // tq

    kernel = functools.partial(_attn_kernel, n_group=G, d_k=d_k, d_v=d_v)
    return pl.pallas_call(
        kernel,
        out_shape=(
            jax.ShapeDtypeStruct((B, L, n_heads * d_v), out_dtype),
            jax.ShapeDtypeStruct((B, n_heads, L, L), weights_dtype),
        ),
        grid=(B, n_grp, n_qt),   # qt innermost -> k/v blocks keep a constant index (stay resident)
        in_specs=[
            pl.BlockSpec((tq, G * dh), lambda b, g, t: (t, 0)),   # cos (query rows)
            pl.BlockSpec((tq, G * dh), lambda b, g, t: (t, 0)),   # sin (query rows)
            pl.BlockSpec((L, G * dh), lambda b, g, t: (0, 0)),    # cos (key rows, resident)
            pl.BlockSpec((L, G * dh), lambda b, g, t: (0, 0)),    # sin (key rows, resident)
            pl.BlockSpec((1, tq, G * d_k), _qmap(q_off)),
            pl.BlockSpec((1, L, G * d_k), _kvmap(k_off)),
            pl.BlockSpec((1, L, G * d_v), _kvmap(v_off)),
        ],
        out_specs=(
            pl.BlockSpec((1, tq, G * d_v), lambda b, g, t: (b, t, g)),   # lane-dense [B,L,H*dv]
            pl.BlockSpec((1, G, tq, L), lambda b, g, t: (b, g, t, 0)),
        ),
        compiler_params=pltpu.CompilerParams(
            dimension_semantics=("parallel", "parallel", "parallel"),
            vmem_limit_bytes=_VMEM_LIMIT),
    )(cos_g, sin_g, cos_g, sin_g, q_src, k_src, v_src)


# ---------------------------------------------------------------------------
# Rotary tables (half-split form; ABT resets positions for the second half of the sequence)
# ---------------------------------------------------------------------------
def _rope_tables(L, d_k, theta=10000.0):
    inv_freq = 1.0 / (theta ** (jnp.arange(0, d_k, 2, dtype=jnp.float32) / d_k))   # [dh]
    half = L // 2
    pos = jnp.concatenate([jnp.arange(half), jnp.arange(L - half)]).astype(jnp.float32)
    freqs = pos[:, None] * inv_freq[None, :]                                        # [L, dh]
    return jnp.cos(freqs), jnp.sin(freqs)


# ---------------------------------------------------------------------------
# Parameter preparation (do once):
#   * fold softmax scale into W_Q / b_Q
#   * group-level half-split column permutation of W_Q / W_K (interleaved rotary -> dense
#     group-vectorized half-split rotary; Q.K^T is invariant since Q and K get the same perm)
#   * fuse W_Q|W_K|W_V into one projection weight; cast weights to bf16 (biases stay f32)
# ---------------------------------------------------------------------------
def prepare_params(params, group=None):
    H, dk, dv = params["n_heads"], params["d_k"], params["d_v"]
    d_model = params["w_q"].shape[0]
    scale = float(d_model // H) ** (-0.5)          # matches torch: head_dim ** -0.5
    G = _pick_head_group(H, dk, dv) if group is None else group
    dh = dk // 2
    n_grp = H // G

    heads = np.arange(H).reshape(n_grp, G)
    even = np.arange(0, dk, 2)
    odd = np.arange(1, dk, 2)
    first = heads[:, :, None] * dk + even[None, None, :]     # [n_grp, G, dh]
    second = heads[:, :, None] * dk + odd[None, None, :]
    perm = np.concatenate([first.reshape(n_grp, G * dh),
                           second.reshape(n_grp, G * dh)], axis=1).reshape(-1)

    w_q = (params["w_q"][:, perm] * scale).astype(jnp.bfloat16)
    b_q = (params["b_q"][perm] * scale).astype(jnp.float32)
    w_k = params["w_k"][:, perm].astype(jnp.bfloat16)
    b_k = params["b_k"][perm].astype(jnp.float32)
    w_v = params["w_v"].astype(jnp.bfloat16)
    b_v = params["b_v"].astype(jnp.float32)

    prepared = dict(params)
    prepared.update(
        group=G,
        w_q=w_q, b_q=b_q, w_k=w_k, b_k=b_k, w_v=w_v, b_v=b_v,
        w_o=params["w_o"].astype(jnp.bfloat16),
        b_o=params["b_o"].astype(jnp.float32),
        w_qkv=jnp.concatenate([w_q, w_k, w_v], axis=1),
        b_qkv=jnp.concatenate([b_q, b_k, b_v]),
    )
    return prepared


# ---------------------------------------------------------------------------
# MultiheadAttention forward
# ---------------------------------------------------------------------------
def multihead_attention(params, Q, K=None, V=None, *, weights_dtype=jnp.float32):
    """
    Q, K, V: [bs, seq_len, d_model]
    returns: output [bs, seq_len, d_model], attn_weights [bs, n_heads, seq_len, seq_len]
    """
    if "w_qkv" not in params:
        params = prepare_params(params)

    H, dk, dv = params["n_heads"], params["d_k"], params["d_v"]
    G = params["group"]
    B, L, d_model = Q.shape
    M = B * L

    cos, sin = _rope_tables(L, dk)                 # [L, dk//2]
    cos_g = jnp.tile(cos, (1, G))                  # [L, G*dk//2] group-vectorized tables
    sin_g = jnp.tile(sin, (1, G))

    self_attn = (K is None) and (V is None)
    fused = self_attn and (dk == dv) and (G * dk) % 128 == 0
    if fused:
        # fused QKV projection; attention reads q/k/v straight from the fused activation.
        # Block-column offsets below are in G*d_v block units, which requires d_k == d_v.
        assert dk == dv
        qkv = pallas_linear(Q.reshape(M, d_model), params["w_qkv"], params["b_qkv"])
        qkv = qkv.reshape(B, L, 2 * H * dk + H * dv)
        q_src = k_src = v_src = qkv
        n_grp = H // G
        q_off, k_off, v_off = 0, n_grp, 2 * n_grp
    else:
        K = Q if K is None else K
        V = Q if V is None else V
        assert K.shape[1] == L and V.shape[1] == L, "differing q/kv lengths not supported"
        q_src = pallas_linear(Q.reshape(M, d_model), params["w_q"], params["b_q"]).reshape(B, L, H * dk)
        k_src = pallas_linear(K.reshape(M, d_model), params["w_k"], params["b_k"]).reshape(B, L, H * dk)
        v_src = pallas_linear(V.reshape(M, d_model), params["w_v"], params["b_v"]).reshape(B, L, H * dv)
        q_off = k_off = v_off = 0

    out, attn_weights = pallas_mha_attention(
        q_src, k_src, v_src, cos_g, sin_g,
        n_heads=H, d_k=dk, d_v=dv, group=G,
        q_off=q_off, k_off=k_off, v_off=v_off,
        weights_dtype=weights_dtype)

    # output projection (attention output is already lane-dense [B, L, H*dv])
    out = pallas_linear(out.reshape(M, H * dv), params["w_o"], params["b_o"]).reshape(B, L, d_model)
    return out, attn_weights


# ---------------------------------------------------------------------------
# Plain-JAX reference (mirrors the torch module) for correctness checking
# ---------------------------------------------------------------------------
def _reference_mha(params, Q, K=None, V=None):
    H, dk, dv = params["n_heads"], params["d_k"], params["d_v"]
    B, L, d_model = Q.shape
    K = Q if K is None else K
    V = Q if V is None else V
    hp = lax.Precision.HIGHEST

    def lin(x, w, b):
        return jnp.dot(x, w, precision=hp) + b

    q = lin(Q, params["w_q"], params["b_q"]).reshape(B, L, H, dk).transpose(0, 2, 1, 3)
    k = lin(K, params["w_k"], params["b_k"]).reshape(B, L, H, dk).transpose(0, 2, 1, 3)
    v = lin(V, params["w_v"], params["b_v"]).reshape(B, L, H, dv).transpose(0, 2, 1, 3)

    def rope_interleaved(x, theta=10000.0):
        D, Lx = x.shape[-1], x.shape[-2]
        inv = 1.0 / (theta ** (jnp.arange(0, D, 2, dtype=jnp.float32) / D))
        f = jnp.arange(Lx, dtype=jnp.float32)[:, None] * inv[None, :]
        f = jnp.repeat(f, 2, axis=-1)
        xr = x.reshape(*x.shape[:-1], D // 2, 2)
        rot = jnp.stack((-xr[..., 1], xr[..., 0]), axis=-1).reshape(x.shape)
        return x * jnp.cos(f) + rot * jnp.sin(f)

    half = L // 2
    q = jnp.concatenate([rope_interleaved(q[..., :half, :]), rope_interleaved(q[..., half:, :])], axis=-2)
    k = jnp.concatenate([rope_interleaved(k[..., :half, :]), rope_interleaved(k[..., half:, :])], axis=-2)

    scale = float(d_model // H) ** (-0.5)
    scores = jnp.einsum("bhqd,bhkd->bhqk", q, k, precision=hp) * scale
    attn = jax.nn.softmax(scores, axis=-1)
    out = jnp.einsum("bhqk,bhkd->bhqd", attn, v, precision=hp)
    out = out.transpose(0, 2, 1, 3).reshape(B, L, H * dv)
    out = jnp.dot(out, params["w_o"], precision=hp) + params["b_o"]
    return out, attn


# ---------------------------------------------------------------------------
# Parameter init (weights stored as [d_in, d_out], transposed vs torch nn.Linear.weight)
# ---------------------------------------------------------------------------
def init_params(key, d_model, n_heads):
    d_k = d_model // n_heads
    d_v = d_model // n_heads
    ks = jax.random.split(key, 8)
    s = 0.1
    return {
        "n_heads": n_heads,
        "d_k": d_k,
        "d_v": d_v,
        "w_q": s * jax.random.normal(ks[0], (d_model, d_k * n_heads), jnp.float32),
        "b_q": s * jax.random.normal(ks[1], (d_k * n_heads,), jnp.float32),
        "w_k": s * jax.random.normal(ks[2], (d_model, d_k * n_heads), jnp.float32),
        "b_k": s * jax.random.normal(ks[3], (d_k * n_heads,), jnp.float32),
        "w_v": s * jax.random.normal(ks[4], (d_model, d_v * n_heads), jnp.float32),
        "b_v": s * jax.random.normal(ks[5], (d_v * n_heads,), jnp.float32),
        "w_o": s * jax.random.normal(ks[6], (n_heads * d_v, d_model), jnp.float32),
        "b_o": s * jax.random.normal(ks[7], (d_model,), jnp.float32),
    }


if __name__ == "__main__":
    key = jax.random.PRNGKey(0)
    k_param, k_x = jax.random.split(key)

    # small but lane-aligned shapes: head_dim=32, group lane width G*head_dim=128
    bs, seq_len, d_model, n_heads = 2, 8, 128, 4
    params = init_params(k_param, d_model, n_heads)
    fast_params = prepare_params(params)      # scale fold + rotary group permutation + QKV fusion

    Q = jax.random.normal(k_x, (bs, seq_len, d_model), jnp.float32)

    out, attn = multihead_attention(fast_params, Q)
    out = jax.block_until_ready(out)
    attn = jax.block_until_ready(attn)

    assert out.shape == (bs, seq_len, d_model)
    assert attn.shape == (bs, n_heads, seq_len, seq_len)
    # softmax rows sum to 1 (approx reciprocal -> small tolerance)
    assert bool(jnp.allclose(jnp.sum(attn, axis=-1), 1.0, atol=5e-3))

    # cross-check against the plain-JAX reference of the original torch forward
    out_ref, attn_ref = _reference_mha(params, Q)
    assert bool(jnp.allclose(out, out_ref, atol=3e-2, rtol=3e-2))
    assert bool(jnp.allclose(attn, attn_ref, atol=2e-2, rtol=2e-2))

    print("KERNEL_OK")
</pallas_src>

<mosaic_0001>
module attributes {stable_mosaic.version = 11 : i64} {
  func.func @_linear_kernel(%arg0: i32, %arg1: i32, %arg2: memref<16x128xf32, #tpu.memory_space<vmem>>, %arg3: memref<128x128xbf16, #tpu.memory_space<vmem>>, %arg4: memref<1x128xf32, #tpu.memory_space<vmem>>, %arg5: memref<16x128xf32, #tpu.memory_space<vmem>>) attributes {dimension_semantics = [#tpu.dimension_semantics<parallel>, #tpu.dimension_semantics<parallel>], iteration_bounds = array<i64: 3, 1>, scalar_prefetch = 0 : i64, scratch_operands = 0 : i64, tpu.core_type = #tpu.core_type<tc>, window_params = [{transform_indices = @transform_0, window_bounds = array<i64: 16, 128>}, {transform_indices = @transform_1, window_bounds = array<i64: 128, 128>}, {transform_indices = @transform_2, window_bounds = array<i64: 1, 128>}, {transform_indices = @transform_3, window_bounds = array<i64: 16, 128>}]} {
    %c0 = arith.constant 0 : index
    %c0_0 = arith.constant 0 : index
    %0 = vector.load %arg2[%c0, %c0_0] : memref<16x128xf32, #tpu.memory_space<vmem>>, vector<16x128xf32>
    %1 = arith.truncf %0 : vector<16x128xf32> to vector<16x128xbf16>
    %c0_1 = arith.constant 0 : index
    %c0_2 = arith.constant 0 : index
    %2 = vector.load %arg3[%c0_1, %c0_2] : memref<128x128xbf16, #tpu.memory_space<vmem>>, vector<128x128xbf16>
    %cst = arith.constant dense<0.000000e+00> : vector<16x128xf32>
    %3 = tpu.matmul %1, %2, %cst {dimension_numbers = #tpu.dot_dimension_numbers<[1], [0], [0], [1], [0, 0, 1, 1], [], []>} : vector<16x128xbf16>, vector<128x128xbf16>, vector<16x128xf32> -> vector<16x128xf32>
    %c0_3 = arith.constant 0 : index
    %c0_4 = arith.constant 0 : index
    %4 = vector.load %arg4[%c0_3, %c0_4] : memref<1x128xf32, #tpu.memory_space<vmem>>, vector<1x128xf32>
    %5 = vector.broadcast %4 : vector<1x128xf32> to vector<16x128xf32>
    %6 = arith.addf %3, %5 : vector<16x128xf32>
    %c0_5 = arith.constant 0 : index
    %c0_6 = arith.constant 0 : index
    %7 = vector.load %arg5[%c0_5, %c0_6] : memref<16x128xf32, #tpu.memory_space<vmem>>, vector<16x128xf32>
    tpu.vector_store %arg5[%c0_5, %c0_6], %6 {strides = array<i32>} : memref<16x128xf32, #tpu.memory_space<vmem>>, vector<16x128xf32>,
    return
  }
  func.func @transform_0(%arg0: i32, %arg1: i32) -> (i32, i32) {
    %c0_i32 = arith.constant 0 : i32
    %c0_i32_0 = arith.constant 0 : i32
    return %arg1, %c0_i32 : i32, i32
  }
  func.func @transform_1(%arg0: i32, %arg1: i32) -> (i32, i32) {
    %c0_i32 = arith.constant 0 : i32
    %c0_i32_0 = arith.constant 0 : i32
    return %c0_i32, %arg0 : i32, i32
  }
  func.func @transform_2(%arg0: i32, %arg1: i32) -> (i32, i32) {
    %c0_i32 = arith.constant 0 : i32
    %c0_i32_0 = arith.constant 0 : i32
    return %c0_i32, %arg0 : i32, i32
  }
  func.func @transform_3(%arg0: i32, %arg1: i32) -> (i32, i32) {
    %c0_i32 = arith.constant 0 : i32
    return %arg1, %arg0 : i32, i32
  }
}

</mosaic_0001>

<llo_original>
// kernel: tpu_custom_call.1
$region0: #{tpu_custom_call.1}
  #allocation0 [shape = 'u32[]', space=smem, size = 0x4, offset = 0x4, fixed_abs, tag = 'smem constant byte address 0x4 - core index']
  #allocation1 [shape = 'u32[144,128]{1,0:T(1,128)}', space=vmem, size = 0x12000, scoped, tag = 'internal scratch']
  %s0 = inlined_call_operand.hbm [shape: f32[16,128], index: 0, kind: input, shape index: {}]
  %s1 = inlined_call_operand.hbm [shape: bf16[128,384], index: 1, kind: input, shape index: {}]
  %s2 = inlined_call_operand.vmem [shape: f32[1,384], index: 2, kind: input, shape index: {}]
  %s3 = inlined_call_operand.hbm [shape: f32[16,384], index: 3, kind: output, shape index: {}]
  %s4 = sld [smem:[#allocation0]]
  $region53: #{tpu_custom_call.1} parent=0
    _
  %s6 = ssub.s32 1, %s4
  %s7 = scalar_select 0, %s6, %s4
  $region1: #{tpu_custom_call.1} parent=0
    #allocation2 [shape = 'u8[8192]{0}', space=vmem, size = 0x2000, scoped, tag = 'input window, operand 0, single buffered']
    #allocation3 [shape = 's32[2]{0}', space=sflag, size = 0x8, scoped, tag = 'scoped memory for tpu_custom_call.1']
    #allocation4 [shape = 's32[2]{0}', space=sflag, size = 0x8, scoped, tag = 'scoped memory for tpu_custom_call.1']
    #allocation5 [shape = 'u8[65536]{0}', space=vmem, size = 0x10000, scoped, tag = 'input window, operand 1']
    #allocation6 [shape = 's32[2]{0}', space=sflag, size = 0x8, scoped, tag = 'scoped memory for tpu_custom_call.1']
    #allocation7 [shape = 'u8[16384]{0}', space=vmem, size = 0x4000, scoped, tag = 'output window, operand 0']
    %8 = vsyncpa [#allocation3], 0
    %9 = vsyncpa [#allocation6], 0
    %s10 = scalar_lea.sflag [#allocation6], 1
    %11 = vsyncpa %s10, 0
    %12 = vsyncpa [#allocation4], 0
    %s13 = scalar_lea.sflag [#allocation4], 1
    %14 = vsyncpa %s13, 0
    loop: start=0, step=1, limit=5
    $region2: #{tpu_custom_call.1} parent=1 // loop_pre_header
      _
    $region3: #{tpu_custom_call.1} parent=1 // loop_header
      %s16 = sphi 0, %s20
      %p17 = scmp.ge.s32.totalorder %s16, 5
      %s23 = sphi 0, %s35
      %s24 = sphi 0, %s31
      %s25 = sphi 0, %s23
      %s26 = sphi 0, %s24
      %s27 = sphi 0, %s25
      %s28 = sphi 0, %s26
      %s38 = sphi 0, %s40
      %s41 = sphi 0, %s38
      %s42 = sphi 0, %s41
      %s58 = sphi 0, %s42
      %s64 = sphi 0, %s66
      %s67 = sphi 0, %s64
      %s68 = sphi 0, %s67
      %s84 = sphi 0, %s68
      %s90 = sphi 0, %s92
      %s93 = sphi 0, %s90
      %s94 = sphi 0, %s93
      %s110 = sphi 0, %s94
      %s118 = sphi 0, %s120
      %s121 = sphi 0, %s118
      %s122 = sphi 0, %s121
      %s138 = sphi 0, %s122
    $region4: #{tpu_custom_call.1} parent=1 // loop_header_branch
      %19 = sbr.rel (%p17) target = $region8
    $region5: #{tpu_custom_call.1} parent=1 // loop_body
      %s21 = ssub.s32 %s16, 1
      %s22 = ssub.s32 %s16, 2
      %s29 = sadd.s32 1, %s24
      %p30 = scmp.ge.s32.totalorder %s29, 1
      %s31 = scalar_select %p30, 0, %s29
      %s32 = sadd.s32 1, %s23
      %s33 = scalar_select %p30, %s32, %s23
      %p34 = scmp.ge.s32.totalorder %s33, 3
      %s35 = scalar_select %p34, 0, %s33
      %s36 = ssub.s32 %s24, %s31
      %p37 = scmp.eq.s32.totalorder %s36, 0
      %s39 = sadd.s32 %s38, 1
      %s40 = scalar_select %p37, %s38, %s39
      %p43 = pneg %p37
      %p44 = scmp.eq.s32.totalorder %s16, 2
      %p45 = por %p43, %p44
      %p46 = scmp.ne.s32.totalorder %s38, %s41
      %p47 = scmp.eq.s32.totalorder %s16, 0
      %p48 = por %p46, %p47
      %p49 = scmp.ne.s32.totalorder %s38, %s41
      %p50 = scmp.eq.s32.totalorder %s21, 2
      %p51 = por %p49, %p50
      %p52 = scmp.ne.s32.totalorder %s41, %s42
      %p53 = scmp.eq.s32.totalorder %s21, 0
      %p54 = por %p52, %p53
      %p55 = scmp.ne.s32.totalorder %s41, %s42
      %p56 = scmp.eq.s32.totalorder %s22, 2
      %p57 = por %p55, %p56
      %p59 = scmp.ne.s32.totalorder %s42, %s58
      %p60 = scmp.eq.s32.totalorder %s22, 0
      %p61 = por %p59, %p60
      %s62 = ssub.s32 %s23, %s35
      %p63 = scmp.eq.s32.totalorder %s62, 0
      %s65 = sadd.s32 %s64, 1
      %s66 = scalar_select %p63, %s64, %s65
      %p69 = pneg %p63
      %p70 = scmp.eq.s32.totalorder %s16, 2
      %p71 = por %p69, %p70
      %p72 = scmp.ne.s32.totalorder %s64, %s67
      %p73 = scmp.eq.s32.totalorder %s16, 0
      %p74 = por %p72, %p73
      %p75 = scmp.ne.s32.totalorder %s64, %s67
      %p76 = scmp.eq.s32.totalorder %s21, 2
      %p77 = por %p75, %p76
      %p78 = scmp.ne.s32.totalorder %s67, %s68
      %p79 = scmp.eq.s32.totalorder %s21, 0
      %p80 = por %p78, %p79
      %p81 = scmp.ne.s32.totalorder %s67, %s68
      %p82 = scmp.eq.s32.totalorder %s22, 2
      %p83 = por %p81, %p82
      %p85 = scmp.ne.s32.totalorder %s68, %s84
      %p86 = scmp.eq.s32.totalorder %s22, 0
      %p87 = por %p85, %p86
      %s88 = ssub.s32 %s23, %s35
      %p89 = scmp.eq.s32.totalorder %s88, 0
      %s91 = sadd.s32 %s90, 1
      %s92 = scalar_select %p89, %s90, %s91
      %p95 = pneg %p89
      %p96 = scmp.eq.s32.totalorder %s16, 2
      %p97 = por %p95, %p96
      %p98 = scmp.ne.s32.totalorder %s90, %s93
      %p99 = scmp.eq.s32.totalorder %s16, 0
      %p100 = por %p98, %p99
      %p101 = scmp.ne.s32.totalorder %s90, %s93
      %p102 = scmp.eq.s32.totalorder %s21, 2
      %p103 = por %p101, %p102
      %p104 = scmp.ne.s32.totalorder %s93, %s94
      %p105 = scmp.eq.s32.totalorder %s21, 0
      %p106 = por %p104, %p105
      %p107 = scmp.ne.s32.totalorder %s93, %s94
      %p108 = scmp.eq.s32.totalorder %s22, 2
      %p109 = por %p107, %p108
      %p111 = scmp.ne.s32.totalorder %s94, %s110
      %p112 = scmp.eq.s32.totalorder %s22, 0
      %p113 = por %p111, %p112
      %s114 = ssub.s32 %s24, %s31
      %s115 = ssub.s32 %s23, %s35
      %s116 = sor.u32 %s114, %s115
      %p117 = scmp.eq.s32.totalorder %s116, 0
      %s119 = sadd.s32 %s118, 1
      %s120 = scalar_select %p117, %s118, %s119
      %p123 = pneg %p117
      %p124 = scmp.eq.s32.totalorder %s16, 2
      %p125 = por %p123, %p124
      %p126 = scmp.ne.s32.totalorder %s118, %s121
      %p127 = scmp.eq.s32.totalorder %s16, 0
      %p128 = por %p126, %p127
      %p129 = scmp.ne.s32.totalorder %s118, %s121
      %p130 = scmp.eq.s32.totalorder %s21, 2
      %p131 = por %p129, %p130
      %p132 = scmp.ne.s32.totalorder %s121, %s122
      %p133 = scmp.eq.s32.totalorder %s21, 0
      %p134 = por %p132, %p133
      %p135 = scmp.ne.s32.totalorder %s121, %s122
      %p136 = scmp.eq.s32.totalorder %s22, 2
      %p137 = por %p135, %p136
      %p139 = scmp.ne.s32.totalorder %s122, %s138
      %p140 = scmp.eq.s32.totalorder %s22, 0
      %p141 = por %p139, %p140
      %p142 = scmp.le.s32.totalorder 1, %s16
      %p143 = scmp.lt.s32.totalorder %s16, 4
      %p144 = pnand %p142, %p143
      %p145 = pneg %p144
      // Predicated region
      $region9: #{tpu_custom_call.1} parent=5 // pred_check
        _
      $region10: #{tpu_custom_call.1} parent=5 // pred_check_branch
        %147 = sbr.rel (%p144) target = $region12
      $region11: #{tpu_custom_call.1} parent=5 // pred_region
        %s148 = ssub.s32 %s16, 1
        // Predicated region
        $region13: #{tpu_custom_call.1} parent=11 // pred_check
          %p149 = pneg %p54
        $region14: #{tpu_custom_call.1} parent=11 // pred_check_branch
          %151 = sbr.rel (%p149) target = $region16
        $region15: #{tpu_custom_call.1} parent=11 // pred_region
          %s152 = smul.u32 2, %s26
          %s154 = ssub.s32 256, 256
          %155 = vsyncadd [#allocation3], %s154
          %s156 = smul.addr %s152, 128
          %s157 = scalar_lea.hbm %s0, %s156
          %s158 = sshll.u32 [#allocation2], 4
          %s159 = int_to_ptr.vmem [resolvable:$true] %s158
          %164 = dma.hbm_to_vmem [thread:$0]  %s157, 256, %s159, [#allocation3], 128, 128, 8
        $region16: #{tpu_custom_call.1} parent=11 // pred_fallthru
          _
      $region12: #{tpu_custom_call.1} parent=5 // pred_fallthru
        _
      %p165 = scmp.lt.s32.totalorder %s16, 3
      // Predicated region
      $region17: #{tpu_custom_call.1} parent=5 // pred_check
        %p166 = pneg %p165
      $region18: #{tpu_custom_call.1} parent=5 // pred_check_branch
        %168 = sbr.rel (%p166) target = $region20
      $region19: #{tpu_custom_call.1} parent=5 // pred_region
        // Predicated region
        $region21: #{tpu_custom_call.1} parent=19 // pred_check
          %p169 = pneg %p74
        $region22: #{tpu_custom_call.1} parent=19 // pred_check_branch
          %171 = sbr.rel (%p169) target = $region24
        $region23: #{tpu_custom_call.1} parent=19 // pred_region
          %s172 = sand.u32 %s64, 1
          %s173 = scalar_lea.sflag [#allocation6], %s172
          %s174 = sand.u32 %s64, 1
          %s175 = smul.addr %s174, 64
          %s176 = scalar_lea.vmem [#allocation5], %s175
          %s178 = ssub.s32 1024, 1024
          %179 = vsyncadd %s173, %s178
          %s180 = smul.addr %s23, 64
          %s181 = scalar_lea.hbm %s1, %s180
          %s182 = sshll.u32 %s176, 4
          %s183 = int_to_ptr.vmem [resolvable:$true] %s182
          %188 = dma.hbm_to_vmem [thread:$0]  %s181, 1024, %s183, %s173, 192, 64, 4
        $region24: #{tpu_custom_call.1} parent=19 // pred_fallthru
          _
        // Predicated region
        $region25: #{tpu_custom_call.1} parent=19 // pred_check
          %p189 = pneg %p100
        $region26: #{tpu_custom_call.1} parent=19 // pred_check_branch
          %191 = sbr.rel (%p189) target = $region28
        $region27: #{tpu_custom_call.1} parent=19 // pred_region
          %p192 = scmp.lt.s32.totalorder %s23, 2
          %s193 = scalar_select %p192, %s23, 2
          %s194 = scalar_lea.vmem %s2, %s193
        $region28: #{tpu_custom_call.1} parent=19 // pred_fallthru
          _
      $region20: #{tpu_custom_call.1} parent=5 // pred_fallthru
        _
      %p195 = scmp.le.s32.totalorder 1, %s16
      %p196 = scmp.lt.s32.totalorder %s16, 4
      %p197 = pnand %p195, %p196
      %p198 = pneg %p197
      // Predicated region
      $region29: #{tpu_custom_call.1} parent=5 // pred_check
        _
      $region30: #{tpu_custom_call.1} parent=5 // pred_check_branch
        %200 = sbr.rel (%p197) target = $region32
      $region31: #{tpu_custom_call.1} parent=5 // pred_region
        %s201 = ssub.s32 %s16, 1
        // Predicated region
        $region33: #{tpu_custom_call.1} parent=31 // pred_check
          %p202 = pneg %p54
        $region34: #{tpu_custom_call.1} parent=31 // pred_check_branch
          %204 = sbr.rel (%p202) target = $region36
        $region35: #{tpu_custom_call.1} parent=31 // pred_region
          %205 = dma.done [#allocation3], 256
        $region36: #{tpu_custom_call.1} parent=31 // pred_fallthru
          _
        %s206 = sand.u32 %s67, 1
        %s207 = scalar_lea.sflag [#allocation6], %s206
        %s208 = sand.u32 %s67, 1
        %s209 = smul.addr %s208, 64
        %s210 = scalar_lea.vmem [#allocation5], %s209
        // Predicated region
        $region37: #{tpu_custom_call.1} parent=31 // pred_check
          %p211 = pneg %p80
        $region38: #{tpu_custom_call.1} parent=31 // pred_check_branch
          %213 = sbr.rel (%p211) target = $region40
        $region39: #{tpu_custom_call.1} parent=31 // pred_region
          %214 = dma.done %s207, 1024
        $region40: #{tpu_custom_call.1} parent=31 // pred_fallthru
          _
        %p215 = pneg %p54
        %p216 = pneg %p51
        %s217 = sand.u32 %s67, 1
        %s218 = scalar_lea.sflag [#allocation6], %s217
        %s219 = sand.u32 %s67, 1
        %s220 = smul.addr %s219, 64
        %s221 = scalar_lea.vmem [#allocation5], %s220
        %p222 = pneg %p80
        %p223 = pneg %p77
        %p224 = scmp.lt.s32.totalorder %s25, 2
        %s225 = scalar_select %p224, %s25, 2
        %s226 = scalar_lea.vmem %s2, %s225
        %p227 = pneg %p106
        %p228 = pneg %p103
        %p229 = pneg %p134
        %p230 = pneg %p131
        %s231 = sand.u32 %s121, 1
        %s232 = scalar_lea.sflag [#allocation4], %s231
        %s233 = sand.u32 %s121, 1
        %s234 = smul.addr %s233, 16
        %s235 = scalar_lea.vmem [#allocation7], %s234
        %s236 = smul.u32 2, %s26
        %p237 = scmp.lt.s32.totalorder %s25, 2
        %s238 = scalar_select %p237, %s25, 2
        %s239 = scalar_lea.vmem %s2, %s238
        %s240 = smul.u32 2, %s26
        %v242 = vld [vmem:[#allocation2] sm:$0xff]
        %v243 = vld [vmem:[#allocation2 + $0x8] sm:$0xff]
        %v244 = vpack.c.bf16 %v243, %v242
        %v245 = vld [vmem:[%s210] sm:$0xf]
        %v246 = vld [vmem:[%s210 + $0x4] sm:$0xf]
        %v247 = vld [vmem:[%s210 + $0x8] sm:$0xf]
        %v248 = vld [vmem:[%s210 + $0xc] sm:$0xf]
        %v249 = vld [vmem:[%s210 + $0x10] sm:$0xf]
        %v250 = vld [vmem:[%s210 + $0x14] sm:$0xf]
        %v251 = vld [vmem:[%s210 + $0x18] sm:$0xf]
        %v252 = vld [vmem:[%s210 + $0x1c] sm:$0xf]
        %v253 = vld [vmem:[%s210 + $0x20] sm:$0xf]
        %v254 = vld [vmem:[%s210 + $0x24] sm:$0xf]
        %v255 = vld [vmem:[%s210 + $0x28] sm:$0xf]
        %v256 = vld [vmem:[%s210 + $0x2c] sm:$0xf]
        %v257 = vld [vmem:[%s210 + $0x30] sm:$0xf]
        %v258 = vld [vmem:[%s210 + $0x34] sm:$0xf]
        %v259 = vld [vmem:[%s210 + $0x38] sm:$0xf]
        %v260 = vld [vmem:[%s210 + $0x3c] sm:$0xf]
        %v261 = vld [vmem:[%s239] sm:$0x1]
        %v263 = vlaneseq
        %v264 = vshrl.u32 %v263, 7
        %v265 = vsub.s32 0, %v264
        %v266 = vrot.slane %v261, %v265
        %v284 = vunpack.c.l.b16 %v245
        %v285 = vunpack.c.l.b16 %v246
        %v286 = vunpack.c.l.b16 %v247
        %v287 = vunpack.c.l.b16 %v248
        %v288 = vunpack.c.l.b16 %v249
        %v289 = vunpack.c.l.b16 %v250
        %v290 = vunpack.c.l.b16 %v251
        %v291 = vunpack.c.l.b16 %v252
        %v292 = vunpack.c.l.b16 %v253
        %v293 = vunpack.c.l.b16 %v254
        %v294 = vunpack.c.l.b16 %v255
        %v295 = vunpack.c.l.b16 %v256
        %v296 = vunpack.c.l.b16 %v257
        %v297 = vunpack.c.l.b16 %v258
        %v298 = vunpack.c.l.b16 %v259
        %v299 = vunpack.c.l.b16 %v260
        %v300 = vpack.c.b16 %v285, %v284
        %v301 = vpack.c.b16 %v287, %v286
        %v302 = vpack.c.b16 %v289, %v288
        %v303 = vpack.c.b16 %v291, %v290
        %v304 = vpack.c.b16 %v293, %v292
        %v305 = vpack.c.b16 %v295, %v294
        %v306 = vpack.c.b16 %v297, %v296
        %v307 = vpack.c.b16 %v299, %v298
        %316 = vmatprep.subr.bf16.mxu0 0
        %317 = vmatpush1.bf16.msra.mxu0 %v300
        %318 = vmatprep.subr.bf16.mxu0 0
        %319 = vmatpush1.bf16.msra.mxu0 %v301
        %320 = vmatprep.subr.bf16.mxu0 0
        %321 = vmatpush1.bf16.msra.mxu0 %v302
        %322 = vmatprep.subr.bf16.mxu0 0
        %323 = vmatpush1.bf16.msra.mxu0 %v303
        %324 = vmatprep.subr.bf16.mxu0 0
        %325 = vmatpush1.bf16.msra.mxu0 %v304
        %326 = vmatprep.subr.bf16.mxu0 0
        %327 = vmatpush1.bf16.msra.mxu0 %v305
        %328 = vmatprep.subr.bf16.mxu0 0
        %329 = vmatpush1.bf16.msra.mxu0 %v306
        %330 = vmatprep.subr.bf16.mxu0 0
        %331 = vmatpush1.bf16.msra.mxu0 %v307
        %332 = vmatprep.subr.bf16.mxu0 0
        %333 = vmatpush1.bf16.msra.mxu0 0
        %334 = vmatprep.subr.bf16.mxu0 0
        %335 = vmatpush1.bf16.msra.mxu0 0
        %336 = vmatprep.subr.bf16.mxu0 0
        %337 = vmatpush1.bf16.msra.mxu0 0
        %338 = vmatprep.subr.bf16.mxu0 0
        %339 = vmatpush1.bf16.msra.mxu0 0
        %340 = vmatprep.subr.bf16.mxu0 0
        %341 = vmatpush1.bf16.msra.mxu0 0
        %342 = vmatprep.subr.bf16.mxu0 0
        %343 = vmatpush1.bf16.msra.mxu0 0
        %344 = vmatprep.subr.bf16.mxu0 0
        %345 = vmatpush1.bf16.msra.mxu0 0
        %346 = vmatprep.subr.bf16.mxu0 0
        %347 = vmatpush1.bf16.msra.mxu0 0
        %348 = vmatprep.mubr.bf16.mxu0 0
        %349 = vmatmul.mubr.bf16.gmra.mrb[0].mxu0 %v244
        %v350 = vpop.f32.mrb[0].mxu0
        %v351 = vadd.f32 %v266, %v350
        %v352 = vpop.f32.mrb[0].mxu0
        %v353 = vpop.f32.mrb[0].mxu0
        %v354 = vadd.f32 %v266, %v353
        %v355 = vpop.f32.mrb[0].mxu0
        %356 = vdwg.mxu0
        %357 = vst [vmem:[%s235] sm:$0xff] %v351
        %358 = vst [vmem:[%s235 + $0x8] sm:$0xff] %v354
        %s359 = sand.u32 %s121, 1
        %s360 = scalar_lea.sflag [#allocation4], %s359
        %s361 = sand.u32 %s121, 1
        %s362 = smul.addr %s361, 16
        %s363 = scalar_lea.vmem [#allocation7], %s362
        // Predicated region
        $region41: #{tpu_custom_call.1} parent=31 // pred_check
          %p364 = pneg %p131
        $region42: #{tpu_custom_call.1} parent=31 // pred_check_branch
          %366 = sbr.rel (%p364) target = $region44
        $region43: #{tpu_custom_call.1} parent=31 // pred_region
          %s367 = smul.u32 2, %s26
          %s369 = ssub.s32 256, 256
          %370 = vsyncadd %s360, %s369
          %s371 = smul.addr %s367, 3
          %s372 = sadd.s32 %s25, %s371
          %s373 = smul.addr %s372, 128
          %s374 = scalar_lea.hbm %s3, %s373
          %s375 = sshll.u32 %s363, 4
          %s376 = int_to_ptr.vmem [resolvable:$true] %s375
          %381 = dma.vmem_to_hbm [thread:$0]  %s376, 256, %s374, %s360, 128, 384, 8
        $region44: #{tpu_custom_call.1} parent=31 // pred_fallthru
          _
      $region32: #{tpu_custom_call.1} parent=5 // pred_fallthru
        _
      %p382 = scmp.le.s32.totalorder 2, %s16
      // Predicated region
      $region45: #{tpu_custom_call.1} parent=5 // pred_check
        %p383 = pneg %p382
      $region46: #{tpu_custom_call.1} parent=5 // pred_check_branch
        %385 = sbr.rel (%p383) target = $region48
      $region47: #{tpu_custom_call.1} parent=5 // pred_region
        %s386 = ssub.s32 %s16, 2
        // Predicated region
        $region49: #{tpu_custom_call.1} parent=47 // pred_check
          %p387 = pneg %p137
        $region50: #{tpu_custom_call.1} parent=47 // pred_check_branch
          %389 = sbr.rel (%p387) target = $region52
        $region51: #{tpu_custom_call.1} parent=47 // pred_region
          %s390 = sand.u32 %s122, 1
          %s391 = scalar_lea.sflag [#allocation4], %s390
          %s392 = sand.u32 %s122, 1
          %s393 = smul.addr %s392, 16
          %s394 = scalar_lea.vmem [#allocation7], %s393
          %395 = dma.done %s391, 256
        $region52: #{tpu_custom_call.1} parent=47 // pred_fallthru
          _
      $region48: #{tpu_custom_call.1} parent=5 // pred_fallthru
        _
    $region6: #{tpu_custom_call.1} parent=1 // loop_footer
      %s20 = sadd.s32 1, %s16
    $region7: #{tpu_custom_call.1} parent=1 // loop_footer_branch
      %15 = sbr.rel target = $region3
    $region8: #{tpu_custom_call.1} parent=1 // loop_exit
      _
    %396 = vsyncpa [#allocation3], 1
    %s397 = scalar_lea.sflag [#allocation3], 1
    %398 = vsyncpa %s397, 1
    %399 = vsyncpa [#allocation6], 1
    %s400 = scalar_lea.sflag [#allocation6], 1
    %401 = vsyncpa %s400, 1
    %402 = vsyncpa [#allocation4], 1
    %s403 = scalar_lea.sflag [#allocation4], 1
    %404 = vsyncpa %s403, 1

</llo_original>
